<compile_context>
chip_gen: v7x
topology: tpu7x:2x2x1
jax: 0.10.0
libtpu: 0.0.40
codegen_flags: <defaults>
</compile_context>

<pallas_src>
import jax
import jax.numpy as jnp
from jax.experimental import pallas as pl
from jax.experimental.pallas import tpu as pltpu


def _round_up(a, b):
    return ((a + b - 1) // b) * b


def _make_kernel(tk, tn, k_max, x_resident):
    """Kernel body. Prefetch refs (kidx, counts) arrive first, then A, x, out."""

    def kernel(kidx_ref, cnt_ref, a_ref, x_ref, o_ref):
        i = pl.program_id(0)
        j = pl.program_id(1)
        k = pl.program_id(2)

        # Fresh (i, j) output block: zero the f32 accumulator (the out
        # BlockSpec returns the same block for every k -> VMEM-resident).
        @pl.when(k == 0)
        def _init():
            o_ref[...] = jnp.zeros_like(o_ref)

        # Only accumulate for real (nonzero) k-blocks of this row block.
        # Padded schedule entries repeat the last valid block index, so their
        # DMA is a revisit (no traffic) and the compute is gated off here.
        @pl.when(k < cnt_ref[i])
        def _accumulate():
            if x_resident:
                # x is fully resident in VMEM (constant index map); slice the
                # (k-block, j-block) tile out of it.
                kb = kidx_ref[i * k_max + k]
                rs = pl.multiple_of(kb * tk, tk)
                cs = pl.multiple_of(j * tn, tn)
                x_tile = x_ref[pl.ds(rs, tk), pl.ds(cs, tn)]
            else:
                # x block was DMA'd by its own data-dependent index map.
                x_tile = x_ref[...]
            o_ref[...] += jnp.dot(
                a_ref[...], x_tile, preferred_element_type=jnp.float32
            )

    return kernel


def lightgcn_agg_prepare(A, *, tm_max=512, tk_max=1024,
                         compute_dtype=jnp.bfloat16):
    """One-time preprocessing of A: cast, pad, and build the block-sparsity
    schedule.  Reuse the returned dict across all aggregation calls (LightGCN
    propagation layers / training epochs) that share the same adjacency."""
    n, n2 = A.shape
    assert n == n2, "A must be square (n, n)"

    A = jnp.asarray(A).astype(compute_dtype)

    tm = min(tm_max, _round_up(n, 128))
    tk = min(tk_max, _round_up(n, 128))
    n_pm = _round_up(n, tm)   # padded rows of A / rows of out
    n_pk = _round_up(n, tk)   # padded cols of A / rows of x
    A_p = jnp.pad(A, ((0, n_pm - n), (0, n_pk - n)))
    ni, nk = n_pm // tm, n_pk // tk

    # Per row block i: ascending list of nonzero k-block indices (padded by
    # repeating the last valid index -> DMA revisit, no traffic) + count.
    blk_nz = jnp.any(A_p.reshape(ni, tm, nk, tk) != 0, axis=(1, 3))   # (ni, nk)
    counts = jnp.sum(blk_nz, axis=1).astype(jnp.int32)                # (ni,)
    k_max = int(jnp.max(counts))   # longest schedule -> k grid extent

    pos = jnp.arange(nk, dtype=jnp.int32)
    sort_key = jnp.where(blk_nz, pos[None, :], pos[None, :] + nk)
    order = jnp.argsort(sort_key, axis=1).astype(jnp.int32)           # nz first
    last = jnp.maximum(counts - 1, 0)
    last_idx = jnp.take_along_axis(order, last[:, None], axis=1)      # (ni, 1)
    k_keep = max(k_max, 1)
    sched = order[:, :k_keep]
    kidx = jnp.where(pos[None, :k_keep] < counts[:, None], sched, last_idx)
    kidx = kidx.reshape(-1).astype(jnp.int32)                         # (ni*k_keep,)

    return dict(A_p=A_p, kidx=kidx, counts=counts, k_max=k_max,
                tm=tm, tk=tk, ni=ni, nk=nk, n=n, n_pm=n_pm, n_pk=n_pk,
                compute_dtype=compute_dtype)


def lightgcn_agg_apply(prep, x, *, tn_max=512,
                       x_resident_budget_bytes=4 << 20,
                       a_buffer_count=2):
    """out = A @ x using a prepared schedule (== torch.sparse.mm(A, x))."""
    n = prep["n"]
    n3, d = x.shape
    assert n3 == n, "x must be (n, d) matching A"

    compute_dtype = prep["compute_dtype"]
    tm, tk = prep["tm"], prep["tk"]
    ni, n_pm, n_pk = prep["ni"], prep["n_pm"], prep["n_pk"]
    k_max = prep["k_max"]

    if k_max == 0:   # A is entirely zero
        return jnp.zeros((n, d), jnp.float32)

    tn = min(tn_max, _round_up(d, 128))
    d_p = _round_up(d, tn)
    nj = d_p // tn

    x_p = jnp.pad(jnp.asarray(x).astype(compute_dtype),
                  ((0, n_pk - n), (0, d_p - d)))

    itemsize = jnp.dtype(compute_dtype).itemsize
    x_resident = (n_pk * d_p * itemsize) <= x_resident_budget_bytes

    def a_map(i, j, k, kidx_ref, cnt_ref):
        return (i, kidx_ref[i * k_max + k])

    a_kwargs = {}
    if a_buffer_count != 2:
        # Deeper A pipelining (e.g. 3 buffers on v7x's fast HBM).
        a_kwargs = dict(pipeline_mode=pl.Buffered(a_buffer_count))
    a_spec = pl.BlockSpec((tm, tk), a_map, **a_kwargs)

    if x_resident:
        # Full x block, constant index -> fetched exactly once for the grid.
        x_spec = pl.BlockSpec((n_pk, d_p),
                              lambda i, j, k, kidx_ref, cnt_ref: (0, 0))
    else:
        # x tiles follow the same sparse k schedule as A.
        x_spec = pl.BlockSpec(
            (tk, tn),
            lambda i, j, k, kidx_ref, cnt_ref: (kidx_ref[i * k_max + k], j))

    out_spec = pl.BlockSpec((tm, tn),
                            lambda i, j, k, kidx_ref, cnt_ref: (i, j))

    # VMEM budget: A (a_buffer_count bufs) + x + f32 out, capped at 48 MiB so
    # it stays inside v7x's 64 MiB physical VMEM (v5e/v6e have 128 MiB).
    a_bytes = a_buffer_count * tm * tk * itemsize
    x_bytes = (2 * n_pk * d_p * itemsize) if x_resident else (2 * tk * tn * itemsize)
    o_bytes = 2 * tm * tn * 4
    needed = a_bytes + x_bytes + o_bytes
    vmem_limit = int(min(48 << 20, max(32 << 20, needed * 5 // 4)))

    kernel = _make_kernel(tk, tn, k_max, x_resident)

    out_p = pl.pallas_call(
        kernel,
        out_shape=jax.ShapeDtypeStruct((n_pm, d_p), jnp.float32),
        grid_spec=pltpu.PrefetchScalarGridSpec(
            num_scalar_prefetch=2,
            grid=(ni, nj, k_max),
            in_specs=[a_spec, x_spec],
            out_specs=out_spec,
        ),
        compiler_params=pltpu.CompilerParams(
            dimension_semantics=("parallel", "parallel", "arbitrary"),
            vmem_limit_bytes=vmem_limit,
        ),
    )(prep["kidx"], prep["counts"], prep["A_p"], x_p)

    return out_p[:n, :d]


def lightgcn_agg(A, x, *, tm_max=512, tk_max=1024, tn_max=512,
                 compute_dtype=jnp.bfloat16,
                 x_resident_budget_bytes=4 << 20, a_buffer_count=2):
    """Convenience wrapper: prepare + apply in one call."""
    prep = lightgcn_agg_prepare(A, tm_max=tm_max, tk_max=tk_max,
                                compute_dtype=compute_dtype)
    return lightgcn_agg_apply(prep, x, tn_max=tn_max,
                              x_resident_budget_bytes=x_resident_budget_bytes,
                              a_buffer_count=a_buffer_count)


if __name__ == "__main__":
    # Small deterministic example: n nodes, hidden_size d (deliberately not
    # multiples of 128 so the padding path is exercised).
    n = 300
    hidden_size = 96  # == self.dim in the module (unused in forward math)

    key = jax.random.PRNGKey(0)
    k_a, k_mask, k_x = jax.random.split(key, 3)

    # LightGCN-style symmetrically-normalized sparse adjacency, kept dense
    # (torch.sparse.mm(A, x) == dense A @ x exactly).
    raw = jax.random.uniform(k_a, (n, n), dtype=jnp.float32)
    mask = (jax.random.uniform(k_mask, (n, n)) < 0.05).astype(jnp.float32)
    adj = raw * mask
    adj = adj + adj.T  # symmetric
    deg = jnp.sum(adj, axis=1)
    d_inv_sqrt = jnp.where(deg > 0, 1.0 / jnp.sqrt(deg), 0.0)
    A = d_inv_sqrt[:, None] * adj * d_inv_sqrt[None, :]
    # Zero out full 128x128 tiles so the block-skip schedule and the
    # padded-k-step gating are exercised in the small-tile configs.
    A = A.at[0:128, 128:256].set(0.0)
    A = A.at[128:256, 0:128].set(0.0)
    A = A.at[128:256, 128:256].set(0.0)

    x = jax.random.normal(k_x, (n, hidden_size), dtype=jnp.float32)

    ref = jnp.dot(A, x, precision=jax.lax.Precision.HIGHEST,
                  preferred_element_type=jnp.float32)

    # 1) default config: bf16 streaming, large tiles, resident x.
    out1 = jax.block_until_ready(lightgcn_agg(A, x))

    # 2) prepare once (as across LightGCN propagation layers / epochs) and
    #    reuse the schedule for two applies: small tiles (multi-block grid,
    #    block skip + variable counts), resident and streamed x.
    prep = lightgcn_agg_prepare(A, tm_max=128, tk_max=128)
    out2 = jax.block_until_ready(lightgcn_agg_apply(prep, x, tn_max=128))
    out3 = jax.block_until_ready(
        lightgcn_agg_apply(prep, x, tn_max=128, x_resident_budget_bytes=0))

    # 3) f32 compute path (tighter numerics, same kernel).
    prep_f32 = lightgcn_agg_prepare(A, compute_dtype=jnp.float32)
    out4 = jax.block_until_ready(lightgcn_agg_apply(prep_f32, x))

    for o in (out1, out2, out3, out4):
        assert o.shape == (n, hidden_size)
    # bf16-input / f32-accum tolerance:
    assert jnp.allclose(out1, ref, atol=3e-2, rtol=3e-2), "mismatch (default bf16)"
    assert jnp.allclose(out2, ref, atol=3e-2, rtol=3e-2), "mismatch (small tiles)"
    assert jnp.allclose(out3, ref, atol=3e-2, rtol=3e-2), "mismatch (streamed x)"
    # f32 path:
    assert jnp.allclose(out4, ref, atol=2e-3, rtol=2e-3), "mismatch (f32 path)"

    print("KERNEL_OK")
</pallas_src>

<mosaic_0001>
module attributes {stable_mosaic.version = 11 : i64} {
  func.func @kernel(%arg0: i32, %arg1: i32, %arg2: i32, %arg3: memref<1xi32, #tpu.memory_space<smem>>, %arg4: memref<1xi32, #tpu.memory_space<smem>>, %arg5: memref<384x384xbf16, #tpu.memory_space<vmem>>, %arg6: memref<384x128xbf16, #tpu.memory_space<vmem>>, %arg7: memref<384x128xf32, #tpu.memory_space<vmem>>) attributes {dimension_semantics = [#tpu.dimension_semantics<parallel>, #tpu.dimension_semantics<parallel>, #tpu.dimension_semantics<arbitrary>], iteration_bounds = array<i64: 1, 1, 1>, scalar_prefetch = 2 : i64, scratch_operands = 0 : i64, tpu.core_type = #tpu.core_type<tc>, window_params = [{transform_indices = @transform_0, window_bounds = array<i64: 384, 384>}, {pipeline_mode = #tpu.pipeline_mode<synchronous>, transform_indices = @transform_1, window_bounds = array<i64: 384, 128>}, {transform_indices = @transform_2, window_bounds = array<i64: 384, 128>}]} {
    %c0_i32 = arith.constant 0 : i32
    %0 = arith.cmpi eq, %arg2, %c0_i32 : i32
    %1 = arith.extui %0 : i1 to i32
    %c0_i32_0 = arith.constant 0 : i32
    %2 = arith.cmpi ne, %1, %c0_i32_0 : i32
    scf.if %2 {
      %cst = arith.constant 0.000000e+00 : f32
      %8 = vector.broadcast %cst : f32 to vector<384x128xf32>
      %c0 = arith.constant 0 : index
      %c0_2 = arith.constant 0 : index
      %9 = vector.load %arg7[%c0, %c0_2] : memref<384x128xf32, #tpu.memory_space<vmem>>, vector<384x128xf32>
      tpu.vector_store %arg7[%c0, %c0_2], %8 {strides = array<i32>} : memref<384x128xf32, #tpu.memory_space<vmem>>, vector<384x128xf32>,
    } else {
    }
    %3 = arith.index_cast %arg0 : i32 to index
    %4 = memref.load %arg4[%3] : memref<1xi32, #tpu.memory_space<smem>>
    %5 = arith.cmpi slt, %arg2, %4 : i32
    %6 = arith.extui %5 : i1 to i32
    %c0_i32_1 = arith.constant 0 : i32
    %7 = arith.cmpi ne, %6, %c0_i32_1 : i32
    scf.if %7 {
      %c1_i32 = arith.constant 1 : i32
      %8 = arith.muli %arg0, %c1_i32 : i32
      %9 = arith.addi %8, %arg2 : i32
      %10 = arith.index_cast %9 : i32 to index
      %11 = memref.load %arg3[%10] : memref<1xi32, #tpu.memory_space<smem>>
      %c384_i32 = arith.constant 384 : i32
      %12 = arith.muli %11, %c384_i32 : i32
      %13 = tpu.assume_multiple %12, 384 : i32
      %c128_i32 = arith.constant 128 : i32
      %14 = arith.muli %arg1, %c128_i32 : i32
      %15 = tpu.assume_multiple %14, 128 : i32
      %16 = arith.index_cast %13 : i32 to index
      %17 = arith.index_cast %15 : i32 to index
      %18 = vector.load %arg6[%16, %17] : memref<384x128xbf16, #tpu.memory_space<vmem>>, vector<384x128xbf16>
      %c0 = arith.constant 0 : index
      %c0_2 = arith.constant 0 : index
      %19 = vector.load %arg7[%c0, %c0_2] : memref<384x128xf32, #tpu.memory_space<vmem>>, vector<384x128xf32>
      %c0_3 = arith.constant 0 : index
      %c0_4 = arith.constant 0 : index
      %20 = vector.load %arg5[%c0_3, %c0_4] : memref<384x384xbf16, #tpu.memory_space<vmem>>, vector<384x384xbf16>
      %cst = arith.constant dense<0.000000e+00> : vector<384x128xf32>
      %21 = tpu.matmul %20, %18, %cst {dimension_numbers = #tpu.dot_dimension_numbers<[1], [0], [0], [1], [0, 0, 1, 1], [], []>} : vector<384x384xbf16>, vector<384x128xbf16>, vector<384x128xf32> -> vector<384x128xf32>
      %22 = arith.addf %19, %21 : vector<384x128xf32>
      %c0_5 = arith.constant 0 : index
      %c0_6 = arith.constant 0 : index
      %23 = vector.load %arg7[%c0_5, %c0_6] : memref<384x128xf32, #tpu.memory_space<vmem>>, vector<384x128xf32>
      tpu.vector_store %arg7[%c0_5, %c0_6], %22 {strides = array<i32>} : memref<384x128xf32, #tpu.memory_space<vmem>>, vector<384x128xf32>,
    } else {
    }
    return
  }
  func.func @transform_0(%arg0: i32, %arg1: i32, %arg2: i32, %arg3: memref<1xi32, #tpu.memory_space<smem>>, %arg4: memref<1xi32, #tpu.memory_space<smem>>) -> (i32, i32) {
    %c1_i32 = arith.constant 1 : i32
    %0 = arith.muli %arg0, %c1_i32 : i32
    %1 = arith.addi %0, %arg2 : i32
    %2 = arith.index_cast %1 : i32 to index
    %3 = memref.load %arg3[%2] : memref<1xi32, #tpu.memory_space<smem>>
    %c0_i32 = arith.constant 0 : i32
    return %arg0, %3 : i32, i32
  }
  func.func @transform_1(%arg0: i32, %arg1: i32, %arg2: i32, %arg3: memref<1xi32, #tpu.memory_space<smem>>, %arg4: memref<1xi32, #tpu.memory_space<smem>>) -> (i32, i32) {
    %c0_i32 = arith.constant 0 : i32
    %c0_i32_0 = arith.constant 0 : i32
    %c0_i32_1 = arith.constant 0 : i32
    return %c0_i32, %c0_i32_0 : i32, i32
  }
  func.func @transform_2(%arg0: i32, %arg1: i32, %arg2: i32, %arg3: memref<1xi32, #tpu.memory_space<smem>>, %arg4: memref<1xi32, #tpu.memory_space<smem>>) -> (i32, i32) {
    %c0_i32 = arith.constant 0 : i32
    return %arg0, %arg1 : i32, i32
  }
}

</mosaic_0001>

<llo_original>
// kernel: tpu_custom_call.1
$region0: #{tpu_custom_call.1}
  #allocation0 [shape = 'u32[]', space=smem, size = 0x4, offset = 0x4, fixed_abs, tag = 'smem constant byte address 0x4 - core index']
  #allocation1 [shape = 'u32[144,128]{1,0:T(1,128)}', space=vmem, size = 0x12000, scoped, tag = 'internal scratch']
  #allocation2 [shape = 's32[1]{0}', space=sflag, size = 0x4, scoped, tag = 'scoped memory for tpu_custom_call.1']
  #allocation3 [shape = 's32[1]{0:T(128)S(6)}', space=smem, size = 0x200, scoped, tag = 'prefetched SMEM operand 0']
  #allocation4 [shape = 's32[1]{0:T(128)S(6)}', space=smem, size = 0x200, scoped, tag = 'prefetched SMEM operand 1']
  %s0 = inlined_call_operand.<no memory space> [shape: s32[1], index: 0, kind: input, shape index: {}]
  %s1 = inlined_call_operand.<no memory space> [shape: s32[1], index: 1, kind: input, shape index: {}]
  %s2 = inlined_call_operand.hbm [shape: bf16[384,384], index: 2, kind: input, shape index: {}]
  %s3 = inlined_call_operand.hbm [shape: bf16[384,128], index: 3, kind: input, shape index: {}]
  %s4 = inlined_call_operand.hbm [shape: f32[384,128], index: 4, kind: output, shape index: {}]
  %s5 = sld [smem:[#allocation0]]
  $region34: #{tpu_custom_call.1} parent=0
    _
  %s7 = ssub.s32 1, %s5
  %s8 = scalar_select 0, %s7, %s5
  %9 = sst [smem:[#allocation3]] %s0
  %10 = sst [smem:[#allocation4]] %s1
  $region1: #{tpu_custom_call.1} parent=0
    #allocation5 [shape = 'u8[294912]{0}', space=vmem, size = 0x48000, scoped, tag = 'input window, operand 2, single buffered']
    #allocation6 [shape = 's32[1]{0}', space=sflag, size = 0x4, scoped, tag = 'scoped memory for tpu_custom_call.1']
    #allocation7 [shape = 's32[1]{0}', space=sflag, size = 0x4, scoped, tag = 'scoped memory for tpu_custom_call.1']
    #allocation8 [shape = 'u8[98304]{0}', space=vmem, size = 0x18000, scoped, tag = 'input window, operand 3, single buffered']
    #allocation9 [shape = 's32[1]{0}', space=sflag, size = 0x4, scoped, tag = 'scoped memory for tpu_custom_call.1']
    #allocation10 [shape = 'u8[196608]{0}', space=vmem, size = 0x30000, scoped, tag = 'output window, operand 0, single buffered']
    %11 = vsyncpa [#allocation6], 0
    %12 = vsyncpa [#allocation9], 0
    %13 = vsyncpa [#allocation7], 0
    // Predicated region
    $region2: #{tpu_custom_call.1} parent=1 // pred_check
      _
    $region3: #{tpu_custom_call.1} parent=1 // pred_check_branch
      %15 = sbr.rel (0) target = $region5
    $region4: #{tpu_custom_call.1} parent=1 // pred_region
      %s16 = sadd.s32 0, 0
      %s17 = sld [smem:[#allocation3 + %s16]]
      %s18 = smul.u32 3, %s17
      %s20 = ssub.s32 9216, 9216
      %21 = vsyncadd [#allocation6], %s20
      %s22 = smul.addr %s18, 64
      %s23 = scalar_lea.hbm %s2, %s22
      %s24 = sshll.u32 [#allocation5], 4
      %s25 = int_to_ptr.vmem [resolvable:$true] %s24
      %30 = dma.hbm_to_vmem [thread:$0]  %s23, 9216, %s25, [#allocation6], 192, 192, 12
    $region5: #{tpu_custom_call.1} parent=1 // pred_fallthru
      _
    // Predicated region
    $region6: #{tpu_custom_call.1} parent=1 // pred_check
      _
    $region7: #{tpu_custom_call.1} parent=1 // pred_check_branch
      %32 = sbr.rel (0) target = $region9
    $region8: #{tpu_custom_call.1} parent=1 // pred_region
      %s34 = ssub.s32 3072, 3072
      %35 = vsyncadd [#allocation9], %s34
      %s36 = sshll.u32 [#allocation8], 4
      %s37 = int_to_ptr.vmem [resolvable:$true] %s36
      %42 = dma.hbm_to_vmem [thread:$0]  %s3, 3072, %s37, [#allocation9], 64, 64, 4
    $region9: #{tpu_custom_call.1} parent=1 // pred_fallthru
      _
    // Predicated region
    $region10: #{tpu_custom_call.1} parent=1 // pred_check
      _
    $region11: #{tpu_custom_call.1} parent=1 // pred_check_branch
      %44 = sbr.rel (0) target = $region13
    $region12: #{tpu_custom_call.1} parent=1 // pred_region
      %45 = dma.done [#allocation6], 9216
    $region13: #{tpu_custom_call.1} parent=1 // pred_fallthru
      _
    // Predicated region
    $region14: #{tpu_custom_call.1} parent=1 // pred_check
      _
    $region15: #{tpu_custom_call.1} parent=1 // pred_check_branch
      %47 = sbr.rel (0) target = $region17
    $region16: #{tpu_custom_call.1} parent=1 // pred_region
      %48 = dma.done [#allocation9], 3072
    $region17: #{tpu_custom_call.1} parent=1 // pred_fallthru
      _
    %s49 = sadd.s32 0, 0
    %s50 = sld [smem:[#allocation3 + %s49]]
    %s51 = smul.u32 3, %s50
    %p53 = scmp.eq.s32.totalorder 0, 0
    // Predicated region
    $region18: #{tpu_custom_call.1} parent=1 // pred_check
      %p54 = pneg %p53
    $region19: #{tpu_custom_call.1} parent=1 // pred_check_branch
      %56 = sbr.rel (%p54) target = $region21
    $region20: #{tpu_custom_call.1} parent=1 // pred_region
      %57 = vst [vmem:[#allocation10] sm:$0xff] 0.0
      %58 = vst [vmem:[#allocation10 + $0x8] sm:$0xff] 0.0
      %59 = vst [vmem:[#allocation10 + $0x10] sm:$0xff] 0.0
      %60 = vst [vmem:[#allocation10 + $0x18] sm:$0xff] 0.0
      %61 = vst [vmem:[#allocation10 + $0x20] sm:$0xff] 0.0
      %62 = vst [vmem:[#allocation10 + $0x28] sm:$0xff] 0.0
      %63 = vst [vmem:[#allocation10 + $0x30] sm:$0xff] 0.0
      %64 = vst [vmem:[#allocation10 + $0x38] sm:$0xff] 0.0
      %65 = vst [vmem:[#allocation10 + $0x40] sm:$0xff] 0.0
      %66 = vst [vmem:[#allocation10 + $0x48] sm:$0xff] 0.0
      %67 = vst [vmem:[#allocation10 + $0x50] sm:$0xff] 0.0
      %68 = vst [vmem:[#allocation10 + $0x58] sm:$0xff] 0.0
      %69 = vst [vmem:[#allocation10 + $0x60] sm:$0xff] 0.0
      %70 = vst [vmem:[#allocation10 + $0x68] sm:$0xff] 0.0
      %71 = vst [vmem:[#allocation10 + $0x70] sm:$0xff] 0.0
      %72 = vst [vmem:[#allocation10 + $0x78] sm:$0xff] 0.0
      %73 = vst [vmem:[#allocation10 + $0x80] sm:$0xff] 0.0
      %74 = vst [vmem:[#allocation10 + $0x88] sm:$0xff] 0.0
      %75 = vst [vmem:[#allocation10 + $0x90] sm:$0xff] 0.0
      %76 = vst [vmem:[#allocation10 + $0x98] sm:$0xff] 0.0
      %77 = vst [vmem:[#allocation10 + $0xa0] sm:$0xff] 0.0
      %78 = vst [vmem:[#allocation10 + $0xa8] sm:$0xff] 0.0
      %79 = vst [vmem:[#allocation10 + $0xb0] sm:$0xff] 0.0
      %80 = vst [vmem:[#allocation10 + $0xb8] sm:$0xff] 0.0
      %81 = vst [vmem:[#allocation10 + $0xc0] sm:$0xff] 0.0
      %82 = vst [vmem:[#allocation10 + $0xc8] sm:$0xff] 0.0
      %83 = vst [vmem:[#allocation10 + $0xd0] sm:$0xff] 0.0
      %84 = vst [vmem:[#allocation10 + $0xd8] sm:$0xff] 0.0
      %85 = vst [vmem:[#allocation10 + $0xe0] sm:$0xff] 0.0
      %86 = vst [vmem:[#allocation10 + $0xe8] sm:$0xff] 0.0
      %87 = vst [vmem:[#allocation10 + $0xf0] sm:$0xff] 0.0
      %88 = vst [vmem:[#allocation10 + $0xf8] sm:$0xff] 0.0
      %89 = vst [vmem:[#allocation10 + $0x100] sm:$0xff] 0.0
      %90 = vst [vmem:[#allocation10 + $0x108] sm:$0xff] 0.0
      %91 = vst [vmem:[#allocation10 + $0x110] sm:$0xff] 0.0
      %92 = vst [vmem:[#allocation10 + $0x118] sm:$0xff] 0.0
      %93 = vst [vmem:[#allocation10 + $0x120] sm:$0xff] 0.0
      %94 = vst [vmem:[#allocation10 + $0x128] sm:$0xff] 0.0
      %95 = vst [vmem:[#allocation10 + $0x130] sm:$0xff] 0.0
      %96 = vst [vmem:[#allocation10 + $0x138] sm:$0xff] 0.0
      %97 = vst [vmem:[#allocation10 + $0x140] sm:$0xff] 0.0
      %98 = vst [vmem:[#allocation10 + $0x148] sm:$0xff] 0.0
      %99 = vst [vmem:[#allocation10 + $0x150] sm:$0xff] 0.0
      %100 = vst [vmem:[#allocation10 + $0x158] sm:$0xff] 0.0
      %101 = vst [vmem:[#allocation10 + $0x160] sm:$0xff] 0.0
      %102 = vst [vmem:[#allocation10 + $0x168] sm:$0xff] 0.0
      %103 = vst [vmem:[#allocation10 + $0x170] sm:$0xff] 0.0
      %104 = vst [vmem:[#allocation10 + $0x178] sm:$0xff] 0.0
    $region21: #{tpu_custom_call.1} parent=1 // pred_fallthru
      _
    %s105 = sld [smem:[#allocation4]]
    %p106 = scmp.lt.s32.totalorder 0, %s105
    // Predicated region
    $region22: #{tpu_custom_call.1} parent=1 // pred_check
      %p107 = pneg %p106
    $region23: #{tpu_custom_call.1} parent=1 // pred_check_branch
      %109 = sbr.rel (%p107) target = $region25
    $region24: #{tpu_custom_call.1} parent=1 // pred_region
      %s110 = sadd.s32 0, 0
      %s111 = sld [smem:[#allocation3 + %s110]]
      %s112 = smul.u32 %s111, 384
      %s113 = smul.u32 0, 128
      %s114 = sshra.s32 %s113, 7
      %s115 = sand.u32 %s113, 127
      %s116 = sshra.s32 %s112, 3
      %s117 = sand.u32 %s112, 7
      %s118 = sadd.s32 %s114, %s116
      %s119 = smul.addr %s118, 4
      %s120 = scalar_lea.vmem [#allocation8], %s119
      %v121 = vld [vmem:[%s120] sm:$0xf]
      %v122 = vld [vmem:[%s120 + $0x4] sm:$0xf]
      %v123 = vld [vmem:[%s120 + $0x8] sm:$0xf]
      %v124 = vld [vmem:[%s120 + $0xc] sm:$0xf]
      %v125 = vld [vmem:[%s120 + $0x10] sm:$0xf]
      %v126 = vld [vmem:[%s120 + $0x14] sm:$0xf]
      %v127 = vld [vmem:[%s120 + $0x18] sm:$0xf]
      %v128 = vld [vmem:[%s120 + $0x1c] sm:$0xf]
      %v129 = vld [vmem:[%s120 + $0x20] sm:$0xf]
      %v130 = vld [vmem:[%s120 + $0x24] sm:$0xf]
      %v131 = vld [vmem:[%s120 + $0x28] sm:$0xf]
      %v132 = vld [vmem:[%s120 + $0x2c] sm:$0xf]
      %v133 = vld [vmem:[%s120 + $0x30] sm:$0xf]
      %v134 = vld [vmem:[%s120 + $0x34] sm:$0xf]
      %v135 = vld [vmem:[%s120 + $0x38] sm:$0xf]
      %v136 = vld [vmem:[%s120 + $0x3c] sm:$0xf]
      %v137 = vld [vmem:[%s120 + $0x40] sm:$0xf]
      %v138 = vld [vmem:[%s120 + $0x44] sm:$0xf]
      %v139 = vld [vmem:[%s120 + $0x48] sm:$0xf]
      %v140 = vld [vmem:[%s120 + $0x4c] sm:$0xf]
      %v141 = vld [vmem:[%s120 + $0x50] sm:$0xf]
      %v142 = vld [vmem:[%s120 + $0x54] sm:$0xf]
      %v143 = vld [vmem:[%s120 + $0x58] sm:$0xf]
      %v144 = vld [vmem:[%s120 + $0x5c] sm:$0xf]
      %v145 = vld [vmem:[%s120 + $0x60] sm:$0xf]
      %v146 = vld [vmem:[%s120 + $0x64] sm:$0xf]
      %v147 = vld [vmem:[%s120 + $0x68] sm:$0xf]
      %v148 = vld [vmem:[%s120 + $0x6c] sm:$0xf]
      %v149 = vld [vmem:[%s120 + $0x70] sm:$0xf]
      %v150 = vld [vmem:[%s120 + $0x74] sm:$0xf]
      %v151 = vld [vmem:[%s120 + $0x78] sm:$0xf]
      %v152 = vld [vmem:[%s120 + $0x7c] sm:$0xf]
      %v153 = vld [vmem:[%s120 + $0x80] sm:$0xf]
      %v154 = vld [vmem:[%s120 + $0x84] sm:$0xf]
      %v155 = vld [vmem:[%s120 + $0x88] sm:$0xf]
      %v156 = vld [vmem:[%s120 + $0x8c] sm:$0xf]
      %v157 = vld [vmem:[%s120 + $0x90] sm:$0xf]
      %v158 = vld [vmem:[%s120 + $0x94] sm:$0xf]
      %v159 = vld [vmem:[%s120 + $0x98] sm:$0xf]
      %v160 = vld [vmem:[%s120 + $0x9c] sm:$0xf]
      %v161 = vld [vmem:[%s120 + $0xa0] sm:$0xf]
      %v162 = vld [vmem:[%s120 + $0xa4] sm:$0xf]
      %v163 = vld [vmem:[%s120 + $0xa8] sm:$0xf]
      %v164 = vld [vmem:[%s120 + $0xac] sm:$0xf]
      %v165 = vld [vmem:[%s120 + $0xb0] sm:$0xf]
      %v166 = vld [vmem:[%s120 + $0xb4] sm:$0xf]
      %v167 = vld [vmem:[%s120 + $0xb8] sm:$0xf]
      %v168 = vld [vmem:[%s120 + $0xbc] sm:$0xf]
      %v169 = vld [vmem:[#allocation10] sm:$0xff]
      %v170 = vld [vmem:[#allocation10 + $0x8] sm:$0xff]
      %v171 = vld [vmem:[#allocation10 + $0x10] sm:$0xff]
      %v172 = vld [vmem:[#allocation10 + $0x18] sm:$0xff]
      %v173 = vld [vmem:[#allocation10 + $0x20] sm:$0xff]
      %v174 = vld [vmem:[#allocation10 + $0x28] sm:$0xff]
      %v175 = vld [vmem:[#allocation10 + $0x30] sm:$0xff]
      %v176 = vld [vmem:[#allocation10 + $0x38] sm:$0xff]
      %v177 = vld [vmem:[#allocation10 + $0x40] sm:$0xff]
      %v178 = vld [vmem:[#allocation10 + $0x48] sm:$0xff]
      %v179 = vld [vmem:[#allocation10 + $0x50] sm:$0xff]
      %v180 = vld [vmem:[#allocation10 + $0x58] sm:$0xff]
      %v181 = vld [vmem:[#allocation10 + $0x60] sm:$0xff]
      %v182 = vld [vmem:[#allocation10 + $0x68] sm:$0xff]
      %v183 = vld [vmem:[#allocation10 + $0x70] sm:$0xff]
      %v184 = vld [vmem:[#allocation10 + $0x78] sm:$0xff]
      %v185 = vld [vmem:[#allocation10 + $0x80] sm:$0xff]
      %v186 = vld [vmem:[#allocation10 + $0x88] sm:$0xff]
      %v187 = vld [vmem:[#allocation10 + $0x90] sm:$0xff]
      %v188 = vld [vmem:[#allocation10 + $0x98] sm:$0xff]
      %v189 = vld [vmem:[#allocation10 + $0xa0] sm:$0xff]
      %v190 = vld [vmem:[#allocation10 + $0xa8] sm:$0xff]
      %v191 = vld [vmem:[#allocation10 + $0xb0] sm:$0xff]
      %v192 = vld [vmem:[#allocation10 + $0xb8] sm:$0xff]
      %v193 = vld [vmem:[#allocation10 + $0xc0] sm:$0xff]
      %v194 = vld [vmem:[#allocation10 + $0xc8] sm:$0xff]
      %v195 = vld [vmem:[#allocation10 + $0xd0] sm:$0xff]
      %v196 = vld [vmem:[#allocation10 + $0xd8] sm:$0xff]
      %v197 = vld [vmem:[#allocation10 + $0xe0] sm:$0xff]
      %v198 = vld [vmem:[#allocation10 + $0xe8] sm:$0xff]
      %v199 = vld [vmem:[#allocation10 + $0xf0] sm:$0xff]
      %v200 = vld [vmem:[#allocation10 + $0xf8] sm:$0xff]
      %v201 = vld [vmem:[#allocation10 + $0x100] sm:$0xff]
      %v202 = vld [vmem:[#allocation10 + $0x108] sm:$0xff]
      %v203 = vld [vmem:[#allocation10 + $0x110] sm:$0xff]
      %v204 = vld [vmem:[#allocation10 + $0x118] sm:$0xff]
      %v205 = vld [vmem:[#allocation10 + $0x120] sm:$0xff]
      %v206 = vld [vmem:[#allocation10 + $0x128] sm:$0xff]
      %v207 = vld [vmem:[#allocation10 + $0x130] sm:$0xff]
      %v208 = vld [vmem:[#allocation10 + $0x138] sm:$0xff]
      %v209 = vld [vmem:[#allocation10 + $0x140] sm:$0xff]
      %v210 = vld [vmem:[#allocation10 + $0x148] sm:$0xff]
      %v211 = vld [vmem:[#allocation10 + $0x150] sm:$0xff]
      %v212 = vld [vmem:[#allocation10 + $0x158] sm:$0xff]
      %v213 = vld [vmem:[#allocation10 + $0x160] sm:$0xff]
      %v214 = vld [vmem:[#allocation10 + $0x168] sm:$0xff]
      %v215 = vld [vmem:[#allocation10 + $0x170] sm:$0xff]
      %v216 = vld [vmem:[#allocation10 + $0x178] sm:$0xff]
      %v217 = vld [vmem:[#allocation5] sm:$0xff]
      %v218 = vld [vmem:[#allocation5 + $0x8] sm:$0xf]
      %v219 = vld [vmem:[#allocation5 + $0xc] sm:$0xff]
      %v220 = vld [vmem:[#allocation5 + $0x14] sm:$0xf]
      %v221 = vld [vmem:[#allocation5 + $0x18] sm:$0xff]
      %v222 = vld [vmem:[#allocation5 + $0x20] sm:$0xf]
      %v223 = vld [vmem:[#allocation5 + $0x24] sm:$0xff]
      %v224 = vld [vmem:[#allocation5 + $0x2c] sm:$0xf]
      %v225 = vld [vmem:[#allocation5 + $0x30] sm:$0xff]
      %v226 = vld [vmem:[#allocation5 + $0x38] sm:$0xf]
      %v227 = vld [vmem:[#allocation5 + $0x3c] sm:$0xff]
      %v228 = vld [vmem:[#allocation5 + $0x44] sm:$0xf]
      %v229 = vld [vmem:[#allocation5 + $0x48] sm:$0xff]
      %v230 = vld [vmem:[#allocation5 + $0x50] sm:$0xf]
      %v231 = vld [vmem:[#allocation5 + $0x54] sm:$0xff]
      %v232 = vld [vmem:[#allocation5 + $0x5c] sm:$0xf]
      %v233 = vld [vmem:[#allocation5 + $0x60] sm:$0xff]
      %v234 = vld [vmem:[#allocation5 + $0x68] sm:$0xf]
      %v235 = vld [vmem:[#allocation5 + $0x6c] sm:$0xff]
      %v236 = vld [vmem:[#allocation5 + $0x74] sm:$0xf]
      %v237 = vld [vmem:[#allocation5 + $0x78] sm:$0xff]
      %v238 = vld [vmem:[#allocation5 + $0x80] sm:$0xf]
      %v239 = vld [vmem:[#allocation5 + $0x84] sm:$0xff]
      %v240 = vld [vmem:[#allocation5 + $0x8c] sm:$0xf]
      %v241 = vld [vmem:[#allocation5 + $0x90] sm:$0xff]
      %v242 = vld [vmem:[#allocation5 + $0x98] sm:$0xf]
      %v243 = vld [vmem:[#allocation5 + $0x9c] sm:$0xff]
      %v244 = vld [vmem:[#allocation5 + $0xa4] sm:$0xf]
      %v245 = vld [vmem:[#allocation5 + $0xa8] sm:$0xff]
      %v246 = vld [vmem:[#allocation5 + $0xb0] sm:$0xf]
      %v247 = vld [vmem:[#allocation5 + $0xb4] sm:$0xff]
      %v248 = vld [vmem:[#allocation5 + $0xbc] sm:$0xf]
      %v249 = vld [vmem:[#allocation5 + $0xc0] sm:$0xff]
      %v250 = vld [vmem:[#allocation5 + $0xc8] sm:$0xf]
      %v251 = vld [vmem:[#allocation5 + $0xcc] sm:$0xff]
      %v252 = vld [vmem:[#allocation5 + $0xd4] sm:$0xf]
      %v253 = vld [vmem:[#allocation5 + $0xd8] sm:$0xff]
      %v254 = vld [vmem:[#allocation5 + $0xe0] sm:$0xf]
      %v255 = vld [vmem:[#allocation5 + $0xe4] sm:$0xff]
      %v256 = vld [vmem:[#allocation5 + $0xec] sm:$0xf]
      %v257 = vld [vmem:[#allocation5 + $0xf0] sm:$0xff]
      %v258 = vld [vmem:[#allocation5 + $0xf8] sm:$0xf]
      %v259 = vld [vmem:[#allocation5 + $0xfc] sm:$0xff]
      %v260 = vld [vmem:[#allocation5 + $0x104] sm:$0xf]
      %v261 = vld [vmem:[#allocation5 + $0x108] sm:$0xff]
      %v262 = vld [vmem:[#allocation5 + $0x110] sm:$0xf]
      %v263 = vld [vmem:[#allocation5 + $0x114] sm:$0xff]
      %v264 = vld [vmem:[#allocation5 + $0x11c] sm:$0xf]
      %v265 = vld [vmem:[#allocation5 + $0x120] sm:$0xff]
      %v266 = vld [vmem:[#allocation5 + $0x128] sm:$0xf]
      %v267 = vld [vmem:[#allocation5 + $0x12c] sm:$0xff]
      %v268 = vld [vmem:[#allocation5 + $0x134] sm:$0xf]
      %v269 = vld [vmem:[#allocation5 + $0x138] sm:$0xff]
      %v270 = vld [vmem:[#allocation5 + $0x140] sm:$0xf]
      %v271 = vld [vmem:[#allocation5 + $0x144] sm:$0xff]
      %v272 = vld [vmem:[#allocation5 + $0x14c] sm:$0xf]
      %v273 = vld [vmem:[#allocation5 + $0x150] sm:$0xff]
      %v274 = vld [vmem:[#allocation5 + $0x158] sm:$0xf]
      %v275 = vld [vmem:[#allocation5 + $0x15c] sm:$0xff]
      %v276 = vld [vmem:[#allocation5 + $0x164] sm:$0xf]
      %v277 = vld [vmem:[#allocation5 + $0x168] sm:$0xff]
      %v278 = vld [vmem:[#allocation5 + $0x170] sm:$0xf]
      %v279 = vld [vmem:[#allocation5 + $0x174] sm:$0xff]
      %v280 = vld [vmem:[#allocation5 + $0x17c] sm:$0xf]
      %v281 = vld [vmem:[#allocation5 + $0x180] sm:$0xff]
      %v282 = vld [vmem:[#allocation5 + $0x188] sm:$0xf]
      %v283 = vld [vmem:[#allocation5 + $0x18c] sm:$0xff]
      %v284 = vld [vmem:[#allocation5 + $0x194] sm:$0xf]
      %v285 = vld [vmem:[#allocation5 + $0x198] sm:$0xff]
      %v286 = vld [vmem:[#allocation5 + $0x1a0] sm:$0xf]
      %v287 = vld [vmem:[#allocation5 + $0x1a4] sm:$0xff]
      %v288 = vld [vmem:[#allocation5 + $0x1ac] sm:$0xf]
      %v289 = vld [vmem:[#allocation5 + $0x1b0] sm:$0xff]
      %v290 = vld [vmem:[#allocation5 + $0x1b8] sm:$0xf]
      %v291 = vld [vmem:[#allocation5 + $0x1bc] sm:$0xff]
      %v292 = vld [vmem:[#allocation5 + $0x1c4] sm:$0xf]
      %v293 = vld [vmem:[#allocation5 + $0x1c8] sm:$0xff]
      %v294 = vld [vmem:[#allocation5 + $0x1d0] sm:$0xf]
      %v295 = vld [vmem:[#allocation5 + $0x1d4] sm:$0xff]
      %v296 = vld [vmem:[#allocation5 + $0x1dc] sm:$0xf]
      %v297 = vld [vmem:[#allocation5 + $0x1e0] sm:$0xff]
      %v298 = vld [vmem:[#allocation5 + $0x1e8] sm:$0xf]
      %v299 = vld [vmem:[#allocation5 + $0x1ec] sm:$0xff]
      %v300 = vld [vmem:[#allocation5 + $0x1f4] sm:$0xf]
      %v301 = vld [vmem:[#allocation5 + $0x1f8] sm:$0xff]
      %v302 = vld [vmem:[#allocation5 + $0x200] sm:$0xf]
      %v303 = vld [vmem:[#allocation5 + $0x204] sm:$0xff]
      %v304 = vld [vmem:[#allocation5 + $0x20c] sm:$0xf]
      %v305 = vld [vmem:[#allocation5 + $0x210] sm:$0xff]
      %v306 = vld [vmem:[#allocation5 + $0x218] sm:$0xf]
      %v307 = vld [vmem:[#allocation5 + $0x21c] sm:$0xff]
      %v308 = vld [vmem:[#allocation5 + $0x224] sm:$0xf]
      %v309 = vld [vmem:[#allocation5 + $0x228] sm:$0xff]
      %v310 = vld [vmem:[#allocation5 + $0x230] sm:$0xf]
      %v311 = vld [vmem:[#allocation5 + $0x234] sm:$0xff]
      %v312 = vld [vmem:[#allocation5 + $0x23c] sm:$0xf]
      %v409 = vunpack.c.l.b16 %v217
      %v410 = vunpack.c.h.b16 %v217
      %v411 = vunpack.c.l.b16 %v218
      %v412 = vunpack.c.l.b16 %v219
      %v413 = vunpack.c.h.b16 %v219
      %v414 = vunpack.c.l.b16 %v220
      %v415 = vunpack.c.l.b16 %v221
      %v416 = vunpack.c.h.b16 %v221
      %v417 = vunpack.c.l.b16 %v222
      %v418 = vunpack.c.l.b16 %v223
      %v419 = vunpack.c.h.b16 %v223
      %v420 = vunpack.c.l.b16 %v224
      %v421 = vunpack.c.l.b16 %v225
      %v422 = vunpack.c.h.b16 %v225
      %v423 = vunpack.c.l.b16 %v226
      %v424 = vunpack.c.l.b16 %v227
      %v425 = vunpack.c.h.b16 %v227
      %v426 = vunpack.c.l.b16 %v228
      %v427 = vunpack.c.l.b16 %v229
      %v428 = vunpack.c.h.b16 %v229
      %v429 = vunpack.c.l.b16 %v230
      %v430 = vunpack.c.l.b16 %v231
      %v431 = vunpack.c.h.b16 %v231
      %v432 = vunpack.c.l.b16 %v232
      %v433 = vunpack.c.l.b16 %v233
      %v434 = vunpack.c.h.b16 %v233
      %v435 = vunpack.c.l.b16 %v234
      %v436 = vunpack.c.l.b16 %v235
      %v437 = vunpack.c.h.b16 %v235
      %v438 = vunpack.c.l.b16 %v236
      %v439 = vunpack.c.l.b16 %v237
      %v440 = vunpack.c.h.b16 %v237
      %v441 = vunpack.c.l.b16 %v238
      %v442 = vunpack.c.l.b16 %v239
      %v443 = vunpack.c.h.b16 %v239
      %v444 = vunpack.c.l.b16 %v240
      %v445 = vunpack.c.l.b16 %v241
      %v446 = vunpack.c.h.b16 %v241
      %v447 = vunpack.c.l.b16 %v242
      %v448 = vunpack.c.l.b16 %v243
      %v449 = vunpack.c.h.b16 %v243
      %v450 = vunpack.c.l.b16 %v244
      %v451 = vunpack.c.l.b16 %v245
      %v452 = vunpack.c.h.b16 %v245
      %v453 = vunpack.c.l.b16 %v246
      %v454 = vunpack.c.l.b16 %v247
      %v455 = vunpack.c.h.b16 %v247
      %v456 = vunpack.c.l.b16 %v248
      %v457 = vunpack.c.l.b16 %v249
      %v458 = vunpack.c.h.b16 %v249
      %v459 = vunpack.c.l.b16 %v250
      %v460 = vunpack.c.l.b16 %v251
      %v461 = vunpack.c.h.b16 %v251
      %v462 = vunpack.c.l.b16 %v252
      %v463 = vunpack.c.l.b16 %v253
      %v464 = vunpack.c.h.b16 %v253
      %v465 = vunpack.c.l.b16 %v254
      %v466 = vunpack.c.l.b16 %v255
      %v467 = vunpack.c.h.b16 %v255
      %v468 = vunpack.c.l.b16 %v256
      %v469 = vunpack.c.l.b16 %v257
      %v470 = vunpack.c.h.b16 %v257
      %v471 = vunpack.c.l.b16 %v258
      %v472 = vunpack.c.l.b16 %v259
      %v473 = vunpack.c.h.b16 %v259
      %v474 = vunpack.c.l.b16 %v260
      %v475 = vunpack.c.l.b16 %v261
      %v476 = vunpack.c.h.b16 %v261
      %v477 = vunpack.c.l.b16 %v262
      %v478 = vunpack.c.l.b16 %v263
      %v479 = vunpack.c.h.b16 %v263
      %v480 = vunpack.c.l.b16 %v264
      %v481 = vunpack.c.l.b16 %v265
      %v482 = vunpack.c.h.b16 %v265
      %v483 = vunpack.c.l.b16 %v266
      %v484 = vunpack.c.l.b16 %v267
      %v485 = vunpack.c.h.b16 %v267
      %v486 = vunpack.c.l.b16 %v268
      %v487 = vunpack.c.l.b16 %v269
      %v488 = vunpack.c.h.b16 %v269
      %v489 = vunpack.c.l.b16 %v270
      %v490 = vunpack.c.l.b16 %v271
      %v491 = vunpack.c.h.b16 %v271
      %v492 = vunpack.c.l.b16 %v272
      %v493 = vunpack.c.l.b16 %v273
      %v494 = vunpack.c.h.b16 %v273
      %v495 = vunpack.c.l.b16 %v274
      %v496 = vunpack.c.l.b16 %v275
      %v497 = vunpack.c.h.b16 %v275
      %v498 = vunpack.c.l.b16 %v276
      %v499 = vunpack.c.l.b16 %v277
      %v500 = vunpack.c.h.b16 %v277
      %v501 = vunpack.c.l.b16 %v278
      %v502 = vunpack.c.l.b16 %v279
      %v503 = vunpack.c.h.b16 %v279
      %v504 = vunpack.c.l.b16 %v280
      %v505 = vunpack.c.l.b16 %v281
      %v506 = vunpack.c.h.b16 %v281
      %v507 = vunpack.c.l.b16 %v282
      %v508 = vunpack.c.l.b16 %v283
      %v509 = vunpack.c.h.b16 %v283
      %v510 = vunpack.c.l.b16 %v284
      %v511 = vunpack.c.l.b16 %v285
      %v512 = vunpack.c.h.b16 %v285
      %v513 = vunpack.c.l.b16 %v286
      %v514 = vunpack.c.l.b16 %v287
      %v515 = vunpack.c.h.b16 %v287
      %v516 = vunpack.c.l.b16 %v288
      %v517 = vunpack.c.l.b16 %v289
      %v518 = vunpack.c.h.b16 %v289
      %v519 = vunpack.c.l.b16 %v290
      %v520 = vunpack.c.l.b16 %v291
      %v521 = vunpack.c.h.b16 %v291
      %v522 = vunpack.c.l.b16 %v292
      %v523 = vunpack.c.l.b16 %v293
      %v524 = vunpack.c.h.b16 %v293
      %v525 = vunpack.c.l.b16 %v294
      %v526 = vunpack.c.l.b16 %v295
      %v527 = vunpack.c.h.b16 %v295
      %v528 = vunpack.c.l.b16 %v296
      %v529 = vunpack.c.l.b16 %v297
      %v530 = vunpack.c.h.b16 %v297
      %v531 = vunpack.c.l.b16 %v298
      %v532 = vunpack.c.l.b16 %v299
      %v533 = vunpack.c.h.b16 %v299
      %v534 = vunpack.c.l.b16 %v300
      %v535 = vunpack.c.l.b16 %v301
      %v536 = vunpack.c.h.b16 %v301
      %v537 = vunpack.c.l.b16 %v302
      %v538 = vunpack.c.l.b16 %v303
      %v539 = vunpack.c.h.b16 %v303
      %v540 = vunpack.c.l.b16 %v304
      %v541 = vunpack.c.l.b16 %v305
      %v542 = vunpack.c.h.b16 %v305
      %v543 = vunpack.c.l.b16 %v306
      %v544 = vunpack.c.l.b16 %v307
      %v545 = vunpack.c.h.b16 %v307
      %v546 = vunpack.c.l.b16 %v308
      %v547 = vunpack.c.l.b16 %v309
      %v548 = vunpack.c.h.b16 %v309
      %v549 = vunpack.c.l.b16 %v310
      %v550 = vunpack.c.l.b16 %v311
      %v551 = vunpack.c.h.b16 %v311
      %v552 = vunpack.c.l.b16 %v312
      %v553 = vpack.c.b16 %v412, %v409
      %v554 = vpack.c.b16 %v413, %v410
      %v555 = vpack.c.b16 %v414, %v411
      %v556 = vpack.c.b16 %v418, %v415
      %v557 = vpack.c.b16 %v419, %v416
      %v558 = vpack.c.b16 %v420, %v417
      %v559 = vpack.c.b16 %v424, %v421
      %v560 = vpack.c.b16 %v425, %v422
      %v561 = vpack.c.b16 %v426, %v423
      %v562 = vpack.c.b16 %v430, %v427
      %v563 = vpack.c.b16 %v431, %v428
      %v564 = vpack.c.b16 %v432, %v429
      %v565 = vpack.c.b16 %v436, %v433
      %v566 = vpack.c.b16 %v437, %v434
      %v567 = vpack.c.b16 %v438, %v435
      %v568 = vpack.c.b16 %v442, %v439
      %v569 = vpack.c.b16 %v443, %v440
      %v570 = vpack.c.b16 %v444, %v441
      %v571 = vpack.c.b16 %v448, %v445
      %v572 = vpack.c.b16 %v449, %v446
      %v573 = vpack.c.b16 %v450, %v447
      %v574 = vpack.c.b16 %v454, %v451
      %v575 = vpack.c.b16 %v455, %v452
      %v576 = vpack.c.b16 %v456, %v453
      %v577 = vpack.c.b16 %v460, %v457
      %v578 = vpack.c.b16 %v461, %v458
      %v579 = vpack.c.b16 %v462, %v459
      %v580 = vpack.c.b16 %v466, %v463
      %v581 = vpack.c.b16 %v467, %v464
      %v582 = vpack.c.b16 %v468, %v465
      %v583 = vpack.c.b16 %v472, %v469
      %v584 = vpack.c.b16 %v473, %v470
      %v585 = vpack.c.b16 %v474, %v471
      %v586 = vpack.c.b16 %v478, %v475
      %v587 = vpack.c.b16 %v479, %v476
      %v588 = vpack.c.b16 %v480, %v477
      %v589 = vpack.c.b16 %v484, %v481
      %v590 = vpack.c.b16 %v485, %v482
      %v591 = vpack.c.b16 %v486, %v483
      %v592 = vpack.c.b16 %v490, %v487
      %v593 = vpack.c.b16 %v491, %v488
      %v594 = vpack.c.b16 %v492, %v489
      %v595 = vpack.c.b16 %v496, %v493
      %v596 = vpack.c.b16 %v497, %v494
      %v597 = vpack.c.b16 %v498, %v495
      %v598 = vpack.c.b16 %v502, %v499
      %v599 = vpack.c.b16 %v503, %v500
      %v600 = vpack.c.b16 %v504, %v501
      %v601 = vpack.c.b16 %v508, %v505
      %v602 = vpack.c.b16 %v509, %v506
      %v603 = vpack.c.b16 %v510, %v507
      %v604 = vpack.c.b16 %v514, %v511
      %v605 = vpack.c.b16 %v515, %v512
      %v606 = vpack.c.b16 %v516, %v513
      %v607 = vpack.c.b16 %v520, %v517
      %v608 = vpack.c.b16 %v521, %v518
      %v609 = vpack.c.b16 %v522, %v519
      %v610 = vpack.c.b16 %v526, %v523
      %v611 = vpack.c.b16 %v527, %v524
      %v612 = vpack.c.b16 %v528, %v525
      %v613 = vpack.c.b16 %v532, %v529
      %v614 = vpack.c.b16 %v533, %v530
      %v615 = vpack.c.b16 %v534, %v531
      %v616 = vpack.c.b16 %v538, %v535
      %v617 = vpack.c.b16 %v539, %v536
      %v618 = vpack.c.b16 %v540, %v537
      %v619 = vpack.c.b16 %v544, %v541
      %v620 = vpack.c.b16 %v545, %v542
      %v621 = vpack.c.b16 %v546, %v543
      %v622 = vpack.c.b16 %v550, %v547
      %v623 = vpack.c.b16 %v551, %v548
      %v624 = vpack.c.b16 %v552, %v549
      %v745 = vunpack.c.l.b16 %v121
      %v746 = vunpack.c.l.b16 %v122
      %v747 = vunpack.c.l.b16 %v123
      %v748 = vunpack.c.l.b16 %v124
      %v749 = vunpack.c.l.b16 %v125
      %v750 = vunpack.c.l.b16 %v126
      %v751 = vunpack.c.l.b16 %v127
      %v752 = vunpack.c.l.b16 %v128
      %v753 = vunpack.c.l.b16 %v129
      %v754 = vunpack.c.l.b16 %v130
      %v755 = vunpack.c.l.b16 %v131
      %v756 = vunpack.c.l.b16 %v132
      %v757 = vunpack.c.l.b16 %v133
      %v758 = vunpack.c.l.b16 %v134
      %v759 = vunpack.c.l.b16 %v135
      %v760 = vunpack.c.l.b16 %v136
      %v761 = vunpack.c.l.b16 %v137
      %v762 = vunpack.c.l.b16 %v138
      %v763 = vunpack.c.l.b16 %v139
      %v764 = vunpack.c.l.b16 %v140
      %v765 = vunpack.c.l.b16 %v141
      %v766 = vunpack.c.l.b16 %v142
      %v767 = vunpack.c.l.b16 %v143
      %v768 = vunpack.c.l.b16 %v144
      %v769 = vunpack.c.l.b16 %v145
      %v770 = vunpack.c.l.b16 %v146
      %v771 = vunpack.c.l.b16 %v147
      %v772 = vunpack.c.l.b16 %v148
      %v773 = vunpack.c.l.b16 %v149
      %v774 = vunpack.c.l.b16 %v150
      %v775 = vunpack.c.l.b16 %v151
      %v776 = vunpack.c.l.b16 %v152
      %v777 = vunpack.c.l.b16 %v153
      %v778 = vunpack.c.l.b16 %v154
      %v779 = vunpack.c.l.b16 %v155
      %v780 = vunpack.c.l.b16 %v156
      %v781 = vunpack.c.l.b16 %v157
      %v782 = vunpack.c.l.b16 %v158
      %v783 = vunpack.c.l.b16 %v159
      %v784 = vunpack.c.l.b16 %v160
      %v785 = vunpack.c.l.b16 %v161
      %v786 = vunpack.c.l.b16 %v162
      %v787 = vunpack.c.l.b16 %v163
      %v788 = vunpack.c.l.b16 %v164
      %v789 = vunpack.c.l.b16 %v165
      %v790 = vunpack.c.l.b16 %v166
      %v791 = vunpack.c.l.b16 %v167
      %v792 = vunpack.c.l.b16 %v168
      %v793 = vpack.c.b16 %v746, %v745
      %v794 = vpack.c.b16 %v748, %v747
      %v795 = vpack.c.b16 %v750, %v749
      %v796 = vpack.c.b16 %v752, %v751
      %v797 = vpack.c.b16 %v754, %v753
      %v798 = vpack.c.b16 %v756, %v755
      %v799 = vpack.c.b16 %v758, %v757
      %v800 = vpack.c.b16 %v760, %v759
      %v801 = vpack.c.b16 %v762, %v761
      %v802 = vpack.c.b16 %v764, %v763
      %v803 = vpack.c.b16 %v766, %v765
      %v804 = vpack.c.b16 %v768, %v767
      %v805 = vpack.c.b16 %v770, %v769
      %v806 = vpack.c.b16 %v772, %v771
      %v807 = vpack.c.b16 %v774, %v773
      %v808 = vpack.c.b16 %v776, %v775
      %v809 = vpack.c.b16 %v778, %v777
      %v810 = vpack.c.b16 %v780, %v779
      %v811 = vpack.c.b16 %v782, %v781
      %v812 = vpack.c.b16 %v784, %v783
      %v813 = vpack.c.b16 %v786, %v785
      %v814 = vpack.c.b16 %v788, %v787
      %v815 = vpack.c.b16 %v790, %v789
      %v816 = vpack.c.b16 %v792, %v791
      %841 = vmatprep.subr.bf16.mxu0 0
      %842 = vmatpush1.bf16.msra.mxu0 %v793
      %843 = vmatprep.subr.bf16.mxu0 0
      %844 = vmatpush1.bf16.msra.mxu0 %v794
      %845 = vmatprep.subr.bf16.mxu0 0
      %846 = vmatpush1.bf16.msra.mxu0 %v795
      %847 = vmatprep.subr.bf16.mxu0 0
      %848 = vmatpush1.bf16.msra.mxu0 %v796
      %849 = vmatprep.subr.bf16.mxu0 0
      %850 = vmatpush1.bf16.msra.mxu0 %v797
      %851 = vmatprep.subr.bf16.mxu0 0
      %852 = vmatpush1.bf16.msra.mxu0 %v798
      %853 = vmatprep.subr.bf16.mxu0 0
      %854 = vmatpush1.bf16.msra.mxu0 %v799
      %855 = vmatprep.subr.bf16.mxu0 0
      %856 = vmatpush1.bf16.msra.mxu0 %v800
      %857 = vmatprep.subr.bf16.mxu0 0
      %858 = vmatpush1.bf16.msra.mxu0 %v801
      %859 = vmatprep.subr.bf16.mxu0 0
      %860 = vmatpush1.bf16.msra.mxu0 %v802
      %861 = vmatprep.subr.bf16.mxu0 0
      %862 = vmatpush1.bf16.msra.mxu0 %v803
      %863 = vmatprep.subr.bf16.mxu0 0
      %864 = vmatpush1.bf16.msra.mxu0 %v804
      %865 = vmatprep.subr.bf16.mxu0 0
      %866 = vmatpush1.bf16.msra.mxu0 %v805
      %867 = vmatprep.subr.bf16.mxu0 0
      %868 = vmatpush1.bf16.msra.mxu0 %v806
      %869 = vmatprep.subr.bf16.mxu0 0
      %870 = vmatpush1.bf16.msra.mxu0 %v807
      %871 = vmatprep.subr.bf16.mxu0 0
      %872 = vmatpush1.bf16.msra.mxu0 %v808
      %873 = vmatprep.mubr.bf16.mxu0 %v554
      %874 = vmatmul.mubr.bf16.gmra.mrb[0].mxu0 %v553
      %v875 = vpop.f32.mrb[0].mxu0
      %v876 = vadd.f32 0.0, %v875
      %v877 = vpop.f32.mrb[0].mxu0
      %v878 = vpop.f32.mrb[0].mxu0
      %v879 = vadd.f32 0.0, %v878
      %v880 = vpop.f32.mrb[0].mxu0
      %881 = vmatprep.mubr.bf16.mxu0 %v557
      %882 = vmatmul.mubr.bf16.gmra.mrb[0].mxu0 %v556
      %v883 = vpop.f32.mrb[0].mxu0
      %v884 = vadd.f32 0.0, %v883
      %v885 = vpop.f32.mrb[0].mxu0
      %v886 = vpop.f32.mrb[0].mxu0
      %v887 = vadd.f32 0.0, %v886
      %v888 = vpop.f32.mrb[0].mxu0
      %889 = vmatprep.mubr.bf16.mxu0 %v560
      %890 = vmatmul.mubr.bf16.gmra.mrb[0].mxu0 %v559
      %v891 = vpop.f32.mrb[0].mxu0
      %v892 = vadd.f32 0.0, %v891
      %v893 = vpop.f32.mrb[0].mxu0
      %v894 = vpop.f32.mrb[0].mxu0
      %v895 = vadd.f32 0.0, %v894
      %v896 = vpop.f32.mrb[0].mxu0
      %897 = vmatprep.mubr.bf16.mxu0 %v563
      %898 = vmatmul.mubr.bf16.gmra.mrb[0].mxu0 %v562
      %v899 = vpop.f32.mrb[0].mxu0
      %v900 = vadd.f32 0.0, %v899
      %v901 = vpop.f32.mrb[0].mxu0
      %v902 = vpop.f32.mrb[0].mxu0
      %v903 = vadd.f32 0.0, %v902
      %v904 = vpop.f32.mrb[0].mxu0
      %905 = vmatprep.mubr.bf16.mxu0 %v566
      %906 = vmatmul.mubr.bf16.gmra.mrb[0].mxu0 %v565
      %v907 = vpop.f32.mrb[0].mxu0
      %v908 = vadd.f32 0.0, %v907
      %v909 = vpop.f32.mrb[0].mxu0
      %v910 = vpop.f32.mrb[0].mxu0
      %v911 = vadd.f32 0.0, %v910
      %v912 = vpop.f32.mrb[0].mxu0
      %913 = vmatprep.mubr.bf16.mxu0 %v569
      %914 = vmatmul.mubr.bf16.gmra.mrb[0].mxu0 %v568
      %v915 = vpop.f32.mrb[0].mxu0
      %v916 = vadd.f32 0.0, %v915
      %v917 = vpop.f32.mrb[0].mxu0
      %v918 = vpop.f32.mrb[0].mxu0
      %v919 = vadd.f32 0.0, %v918
      %v920 = vpop.f32.mrb[0].mxu0
      %921 = vmatprep.mubr.bf16.mxu0 %v572
      %922 = vmatmul.mubr.bf16.gmra.mrb[0].mxu0 %v571
      %v923 = vpop.f32.mrb[0].mxu0
      %v924 = vadd.f32 0.0, %v923
      %v925 = vpop.f32.mrb[0].mxu0
      %v926 = vpop.f32.mrb[0].mxu0
      %v927 = vadd.f32 0.0, %v926
      %v928 = vpop.f32.mrb[0].mxu0
      %929 = vmatprep.mubr.bf16.mxu0 %v575
      %930 = vmatmul.mubr.bf16.gmra.mrb[0].mxu0 %v574
      %v931 = vpop.f32.mrb[0].mxu0
      %v932 = vadd.f32 0.0, %v931
      %v933 = vpop.f32.mrb[0].mxu0
      %v934 = vpop.f32.mrb[0].mxu0
      %v935 = vadd.f32 0.0, %v934
      %v936 = vpop.f32.mrb[0].mxu0
      %937 = vmatprep.mubr.bf16.mxu0 %v578
      %938 = vmatmul.mubr.bf16.gmra.mrb[0].mxu0 %v577
      %v939 = vpop.f32.mrb[0].mxu0
      %v940 = vadd.f32 0.0, %v939
      %v941 = vpop.f32.mrb[0].mxu0
      %v942 = vpop.f32.mrb[0].mxu0
      %v943 = vadd.f32 0.0, %v942
      %v944 = vpop.f32.mrb[0].mxu0
      %945 = vmatprep.mubr.bf16.mxu0 %v581
      %946 = vmatmul.mubr.bf16.gmra.mrb[0].mxu0 %v580
      %v947 = vpop.f32.mrb[0].mxu0
      %v948 = vadd.f32 0.0, %v947
      %v949 = vpop.f32.mrb[0].mxu0
      %v950 = vpop.f32.mrb[0].mxu0
      %v951 = vadd.f32 0.0, %v950
      %v952 = vpop.f32.mrb[0].mxu0
      %953 = vmatprep.mubr.bf16.mxu0 %v584
      %954 = vmatmul.mubr.bf16.gmra.mrb[0].mxu0 %v583
      %v955 = vpop.f32.mrb[0].mxu0
      %v956 = vadd.f32 0.0, %v955
      %v957 = vpop.f32.mrb[0].mxu0
      %v958 = vpop.f32.mrb[0].mxu0
      %v959 = vadd.f32 0.0, %v958
      %v960 = vpop.f32.mrb[0].mxu0
      %961 = vmatprep.mubr.bf16.mxu0 %v587
      %962 = vmatmul.mubr.bf16.gmra.mrb[0].mxu0 %v586
      %v963 = vpop.f32.mrb[0].mxu0
      %v964 = vadd.f32 0.0, %v963
      %v965 = vpop.f32.mrb[0].mxu0
      %v966 = vpop.f32.mrb[0].mxu0
      %v967 = vadd.f32 0.0, %v966
      %v968 = vpop.f32.mrb[0].mxu0
      %969 = vmatprep.mubr.bf16.mxu0 %v590
      %970 = vmatmul.mubr.bf16.gmra.mrb[0].mxu0 %v589
      %v971 = vpop.f32.mrb[0].mxu0
      %v972 = vadd.f32 0.0, %v971
      %v973 = vpop.f32.mrb[0].mxu0
      %v974 = vpop.f32.mrb[0].mxu0
      %v975 = vadd.f32 0.0, %v974
      %v976 = vpop.f32.mrb[0].mxu0
      %977 = vmatprep.mubr.bf16.mxu0 %v593
      %978 = vmatmul.mubr.bf16.gmra.mrb[0].mxu0 %v592
      %v979 = vpop.f32.mrb[0].mxu0
      %v980 = vadd.f32 0.0, %v979
      %v981 = vpop.f32.mrb[0].mxu0
      %v982 = vpop.f32.mrb[0].mxu0
      %v983 = vadd.f32 0.0, %v982
      %v984 = vpop.f32.mrb[0].mxu0
      %985 = vmatprep.mubr.bf16.mxu0 %v596
      %986 = vmatmul.mubr.bf16.gmra.mrb[0].mxu0 %v595
      %v987 = vpop.f32.mrb[0].mxu0
      %v988 = vadd.f32 0.0, %v987
      %v989 = vpop.f32.mrb[0].mxu0
      %v990 = vpop.f32.mrb[0].mxu0
      %v991 = vadd.f32 0.0, %v990
      %v992 = vpop.f32.mrb[0].mxu0
      %993 = vmatprep.mubr.bf16.mxu0 %v599
      %994 = vmatmul.mubr.bf16.gmra.mrb[0].mxu0 %v598
      %v995 = vpop.f32.mrb[0].mxu0
      %v996 = vadd.f32 0.0, %v995
      %v997 = vpop.f32.mrb[0].mxu0
      %v998 = vpop.f32.mrb[0].mxu0
      %v999 = vadd.f32 0.0, %v998
      %v1000 = vpop.f32.mrb[0].mxu0
      %1001 = vmatprep.mubr.bf16.mxu0 %v602
      %1002 = vmatmul.mubr.bf16.gmra.mrb[0].mxu0 %v601
      %v1003 = vpop.f32.mrb[0].mxu0
      %v1004 = vadd.f32 0.0, %v1003
      %v1005 = vpop.f32.mrb[0].mxu0
      %v1006 = vpop.f32.mrb[0].mxu0
      %v1007 = vadd.f32 0.0, %v1006
      %v1008 = vpop.f32.mrb[0].mxu0
      %1009 = vmatprep.mubr.bf16.mxu0 %v605
      %1010 = vmatmul.mubr.bf16.gmra.mrb[0].mxu0 %v604
      %v1011 = vpop.f32.mrb[0].mxu0
      %v1012 = vadd.f32 0.0, %v1011
      %v1013 = vpop.f32.mrb[0].mxu0
      %v1014 = vpop.f32.mrb[0].mxu0
      %v1015 = vadd.f32 0.0, %v1014
      %v1016 = vpop.f32.mrb[0].mxu0
      %1017 = vmatprep.mubr.bf16.mxu0 %v608
      %1018 = vmatmul.mubr.bf16.gmra.mrb[0].mxu0 %v607
      %v1019 = vpop.f32.mrb[0].mxu0
      %v1020 = vadd.f32 0.0, %v1019
      %v1021 = vpop.f32.mrb[0].mxu0
      %v1022 = vpop.f32.mrb[0].mxu0
      %v1023 = vadd.f32 0.0, %v1022
      %v1024 = vpop.f32.mrb[0].mxu0
      %1025 = vmatprep.mubr.bf16.mxu0 %v611
      %1026 = vmatmul.mubr.bf16.gmra.mrb[0].mxu0 %v610
      %v1027 = vpop.f32.mrb[0].mxu0
      %v1028 = vadd.f32 0.0, %v1027
      %v1029 = vpop.f32.mrb[0].mxu0
      %v1030 = vpop.f32.mrb[0].mxu0
      %v1031 = vadd.f32 0.0, %v1030
      %v1032 = vpop.f32.mrb[0].mxu0
      %1033 = vmatprep.mubr.bf16.mxu0 %v614
      %1034 = vmatmul.mubr.bf16.gmra.mrb[0].mxu0 %v613
      %v1035 = vpop.f32.mrb[0].mxu0
      %v1036 = vadd.f32 0.0, %v1035
      %v1037 = vpop.f32.mrb[0].mxu0
      %v1038 = vpop.f32.mrb[0].mxu0
      %v1039 = vadd.f32 0.0, %v1038
      %v1040 = vpop.f32.mrb[0].mxu0
      %1041 = vmatprep.mubr.bf16.mxu0 %v617
      %1042 = vmatmul.mubr.bf16.gmra.mrb[0].mxu0 %v616
      %v1043 = vpop.f32.mrb[0].mxu0
      %v1044 = vadd.f32 0.0, %v1043
      %v1045 = vpop.f32.mrb[0].mxu0
      %v1046 = vpop.f32.mrb[0].mxu0
      %v1047 = vadd.f32 0.0, %v1046
      %v1048 = vpop.f32.mrb[0].mxu0
      %1049 = vmatprep.mubr.bf16.mxu0 %v620
      %1050 = vmatmul.mubr.bf16.gmra.mrb[0].mxu0 %v619
      %v1051 = vpop.f32.mrb[0].mxu0
      %v1052 = vadd.f32 0.0, %v1051
      %v1053 = vpop.f32.mrb[0].mxu0
      %v1054 = vpop.f32.mrb[0].mxu0
      %v1055 = vadd.f32 0.0, %v1054
      %v1056 = vpop.f32.mrb[0].mxu0
      %1057 = vmatprep.mubr.bf16.mxu0 %v623
      %1058 = vmatmul.mubr.bf16.gmra.mrb[0].mxu0 %v622
      %v1059 = vpop.f32.mrb[0].mxu0
      %v1060 = vadd.f32 0.0, %v1059
      %v1061 = vpop.f32.mrb[0].mxu0
      %v1062 = vpop.f32.mrb[0].mxu0
      %v1063 = vadd.f32 0.0, %v1062
      %v1064 = vpop.f32.mrb[0].mxu0
      %1065 = vdwg.mxu0
      %1066 = vmatprep.subr.bf16.mxu0 0
      %1067 = vmatpush1.bf16.msra.mxu0 %v809
      %1068 = vmatprep.subr.bf16.mxu0 0
      %1069 = vmatpush1.bf16.msra.mxu0 %v810
      %1070 = vmatprep.subr.bf16.mxu0 0
      %1071 = vmatpush1.bf16.msra.mxu0 %v811
      %1072 = vmatprep.subr.bf16.mxu0 0
      %1073 = vmatpush1.bf16.msra.mxu0 %v812
      %1074 = vmatprep.subr.bf16.mxu0 0
      %1075 = vmatpush1.bf16.msra.mxu0 %v813
      %1076 = vmatprep.subr.bf16.mxu0 0
      %1077 = vmatpush1.bf16.msra.mxu0 %v814
      %1078 = vmatprep.subr.bf16.mxu0 0
      %1079 = vmatpush1.bf16.msra.mxu0 %v815
      %1080 = vmatprep.subr.bf16.mxu0 0
      %1081 = vmatpush1.bf16.msra.mxu0 %v816
      %1082 = vmatprep.subr.bf16.mxu0 0
      %1083 = vmatpush1.bf16.msra.mxu0 0
      %1084 = vmatprep.subr.bf16.mxu0 0
      %1085 = vmatpush1.bf16.msra.mxu0 0
      %1086 = vmatprep.subr.bf16.mxu0 0
      %1087 = vmatpush1.bf16.msra.mxu0 0
      %1088 = vmatprep.subr.bf16.mxu0 0
      %1089 = vmatpush1.bf16.msra.mxu0 0
      %1090 = vmatprep.subr.bf16.mxu0 0
      %1091 = vmatpush1.bf16.msra.mxu0 0
      %1092 = vmatprep.subr.bf16.mxu0 0
      %1093 = vmatpush1.bf16.msra.mxu0 0
      %1094 = vmatprep.subr.bf16.mxu0 0
      %1095 = vmatpush1.bf16.msra.mxu0 0
      %1096 = vmatprep.subr.bf16.mxu0 0
      %1097 = vmatpush1.bf16.msra.mxu0 0
      %1098 = vmatprep.mubr.bf16.mxu0 0
      %1099 = vmatmul.mubr.bf16.gmra.mrb[0].mxu0 %v555
      %v1100 = vpop.f32.mrb[0].mxu0
      %v1101 = vadd.f32 %v876, %v1100
      %v1102 = vpop.f32.mrb[0].mxu0
      %v1103 = vpop.f32.mrb[0].mxu0
      %v1104 = vadd.f32 %v879, %v1103
      %v1105 = vpop.f32.mrb[0].mxu0
      %1106 = vmatprep.mubr.bf16.mxu0 0
      %1107 = vmatmul.mubr.bf16.gmra.mrb[0].mxu0 %v558
      %v1108 = vpop.f32.mrb[0].mxu0
      %v1109 = vadd.f32 %v884, %v1108
      %v1110 = vpop.f32.mrb[0].mxu0
      %v1111 = vpop.f32.mrb[0].mxu0
      %v1112 = vadd.f32 %v887, %v1111
      %v1113 = vpop.f32.mrb[0].mxu0
      %1114 = vmatprep.mubr.bf16.mxu0 0
      %1115 = vmatmul.mubr.bf16.gmra.mrb[0].mxu0 %v561
      %v1116 = vpop.f32.mrb[0].mxu0
      %v1117 = vadd.f32 %v892, %v1116
      %v1118 = vpop.f32.mrb[0].mxu0
      %v1119 = vpop.f32.mrb[0].mxu0
      %v1120 = vadd.f32 %v895, %v1119
      %v1121 = vpop.f32.mrb[0].mxu0
      %1122 = vmatprep.mubr.bf16.mxu0 0
      %1123 = vmatmul.mubr.bf16.gmra.mrb[0].mxu0 %v564
      %v1124 = vpop.f32.mrb[0].mxu0
      %v1125 = vadd.f32 %v900, %v1124
      %v1126 = vpop.f32.mrb[0].mxu0
      %v1127 = vpop.f32.mrb[0].mxu0
      %v1128 = vadd.f32 %v903, %v1127
      %v1129 = vpop.f32.mrb[0].mxu0
      %1130 = vmatprep.mubr.bf16.mxu0 0
      %1131 = vmatmul.mubr.bf16.gmra.mrb[0].mxu0 %v567
      %v1132 = vpop.f32.mrb[0].mxu0
      %v1133 = vadd.f32 %v908, %v1132
      %v1134 = vpop.f32.mrb[0].mxu0
      %v1135 = vpop.f32.mrb[0].mxu0
      %v1136 = vadd.f32 %v911, %v1135
      %v1137 = vpop.f32.mrb[0].mxu0
      %1138 = vmatprep.mubr.bf16.mxu0 0
      %1139 = vmatmul.mubr.bf16.gmra.mrb[0].mxu0 %v570
      %v1140 = vpop.f32.mrb[0].mxu0
      %v1141 = vadd.f32 %v916, %v1140
      %v1142 = vpop.f32.mrb[0].mxu0
      %v1143 = vpop.f32.mrb[0].mxu0
      %v1144 = vadd.f32 %v919, %v1143
      %v1145 = vpop.f32.mrb[0].mxu0
      %1146 = vmatprep.mubr.bf16.mxu0 0
      %1147 = vmatmul.mubr.bf16.gmra.mrb[0].mxu0 %v573
      %v1148 = vpop.f32.mrb[0].mxu0
      %v1149 = vadd.f32 %v924, %v1148
      %v1150 = vpop.f32.mrb[0].mxu0
      %v1151 = vpop.f32.mrb[0].mxu0
      %v1152 = vadd.f32 %v927, %v1151
      %v1153 = vpop.f32.mrb[0].mxu0
      %1154 = vmatprep.mubr.bf16.mxu0 0
      %1155 = vmatmul.mubr.bf16.gmra.mrb[0].mxu0 %v576
      %v1156 = vpop.f32.mrb[0].mxu0
      %v1157 = vadd.f32 %v932, %v1156
      %v1158 = vpop.f32.mrb[0].mxu0
      %v1159 = vpop.f32.mrb[0].mxu0
      %v1160 = vadd.f32 %v935, %v1159
      %v1161 = vpop.f32.mrb[0].mxu0
      %1162 = vmatprep.mubr.bf16.mxu0 0
      %1163 = vmatmul.mubr.bf16.gmra.mrb[0].mxu0 %v579
      %v1164 = vpop.f32.mrb[0].mxu0
      %v1165 = vadd.f32 %v940, %v1164
      %v1166 = vpop.f32.mrb[0].mxu0
      %v1167 = vpop.f32.mrb[0].mxu0
      %v1168 = vadd.f32 %v943, %v1167
      %v1169 = vpop.f32.mrb[0].mxu0
      %1170 = vmatprep.mubr.bf16.mxu0 0
      %1171 = vmatmul.mubr.bf16.gmra.mrb[0].mxu0 %v582
      %v1172 = vpop.f32.mrb[0].mxu0
      %v1173 = vadd.f32 %v948, %v1172
      %v1174 = vpop.f32.mrb[0].mxu0
      %v1175 = vpop.f32.mrb[0].mxu0
      %v1176 = vadd.f32 %v951, %v1175
      %v1177 = vpop.f32.mrb[0].mxu0
      %1178 = vmatprep.mubr.bf16.mxu0 0
      %1179 = vmatmul.mubr.bf16.gmra.mrb[0].mxu0 %v585
      %v1180 = vpop.f32.mrb[0].mxu0
      %v1181 = vadd.f32 %v956, %v1180
      %v1182 = vpop.f32.mrb[0].mxu0
      %v1183 = vpop.f32.mrb[0].mxu0
      %v1184 = vadd.f32 %v959, %v1183
      %v1185 = vpop.f32.mrb[0].mxu0
      %1186 = vmatprep.mubr.bf16.mxu0 0
      %1187 = vmatmul.mubr.bf16.gmra.mrb[0].mxu0 %v588
      %v1188 = vpop.f32.mrb[0].mxu0
      %v1189 = vadd.f32 %v964, %v1188
      %v1190 = vpop.f32.mrb[0].mxu0
      %v1191 = vpop.f32.mrb[0].mxu0
      %v1192 = vadd.f32 %v967, %v1191
      %v1193 = vpop.f32.mrb[0].mxu0
      %1194 = vmatprep.mubr.bf16.mxu0 0
      %1195 = vmatmul.mubr.bf16.gmra.mrb[0].mxu0 %v591
      %v1196 = vpop.f32.mrb[0].mxu0
      %v1197 = vadd.f32 %v972, %v1196
      %v1198 = vpop.f32.mrb[0].mxu0
      %v1199 = vpop.f32.mrb[0].mxu0
      %v1200 = vadd.f32 %v975, %v1199
      %v1201 = vpop.f32.mrb[0].mxu0
      %1202 = vmatprep.mubr.bf16.mxu0 0
      %1203 = vmatmul.mubr.bf16.gmra.mrb[0].mxu0 %v594
      %v1204 = vpop.f32.mrb[0].mxu0
      %v1205 = vadd.f32 %v980, %v1204
      %v1206 = vpop.f32.mrb[0].mxu0
      %v1207 = vpop.f32.mrb[0].mxu0
      %v1208 = vadd.f32 %v983, %v1207
      %v1209 = vpop.f32.mrb[0].mxu0
      %1210 = vmatprep.mubr.bf16.mxu0 0
      %1211 = vmatmul.mubr.bf16.gmra.mrb[0].mxu0 %v597
      %v1212 = vpop.f32.mrb[0].mxu0
      %v1213 = vadd.f32 %v988, %v1212
      %v1214 = vpop.f32.mrb[0].mxu0
      %v1215 = vpop.f32.mrb[0].mxu0
      %v1216 = vadd.f32 %v991, %v1215
      %v1217 = vpop.f32.mrb[0].mxu0
      %1218 = vmatprep.mubr.bf16.mxu0 0
      %1219 = vmatmul.mubr.bf16.gmra.mrb[0].mxu0 %v600
      %v1220 = vpop.f32.mrb[0].mxu0
      %v1221 = vadd.f32 %v996, %v1220
      %v1222 = vpop.f32.mrb[0].mxu0
      %v1223 = vpop.f32.mrb[0].mxu0
      %v1224 = vadd.f32 %v999, %v1223
      %v1225 = vpop.f32.mrb[0].mxu0
      %1226 = vmatprep.mubr.bf16.mxu0 0
      %1227 = vmatmul.mubr.bf16.gmra.mrb[0].mxu0 %v603
      %v1228 = vpop.f32.mrb[0].mxu0
      %v1229 = vadd.f32 %v1004, %v1228
      %v1230 = vpop.f32.mrb[0].mxu0
      %v1231 = vpop.f32.mrb[0].mxu0
      %v1232 = vadd.f32 %v1007, %v1231
      %v1233 = vpop.f32.mrb[0].mxu0
      %1234 = vmatprep.mubr.bf16.mxu0 0
      %1235 = vmatmul.mubr.bf16.gmra.mrb[0].mxu0 %v606
      %v1236 = vpop.f32.mrb[0].mxu0
      %v1237 = vadd.f32 %v1012, %v1236
      %v1238 = vpop.f32.mrb[0].mxu0
      %v1239 = vpop.f32.mrb[0].mxu0
      %v1240 = vadd.f32 %v1015, %v1239
      %v1241 = vpop.f32.mrb[0].mxu0
      %1242 = vmatprep.mubr.bf16.mxu0 0
      %1243 = vmatmul.mubr.bf16.gmra.mrb[0].mxu0 %v609
      %v1244 = vpop.f32.mrb[0].mxu0
      %v1245 = vadd.f32 %v1020, %v1244
      %v1246 = vpop.f32.mrb[0].mxu0
      %v1247 = vpop.f32.mrb[0].mxu0
      %v1248 = vadd.f32 %v1023, %v1247
      %v1249 = vpop.f32.mrb[0].mxu0
      %1250 = vmatprep.mubr.bf16.mxu0 0
      %1251 = vmatmul.mubr.bf16.gmra.mrb[0].mxu0 %v612
      %v1252 = vpop.f32.mrb[0].mxu0
      %v1253 = vadd.f32 %v1028, %v1252
      %v1254 = vpop.f32.mrb[0].mxu0
      %v1255 = vpop.f32.mrb[0].mxu0
      %v1256 = vadd.f32 %v1031, %v1255
      %v1257 = vpop.f32.mrb[0].mxu0
      %1258 = vmatprep.mubr.bf16.mxu0 0
      %1259 = vmatmul.mubr.bf16.gmra.mrb[0].mxu0 %v615
      %v1260 = vpop.f32.mrb[0].mxu0
      %v1261 = vadd.f32 %v1036, %v1260
      %v1262 = vpop.f32.mrb[0].mxu0
      %v1263 = vpop.f32.mrb[0].mxu0
      %v1264 = vadd.f32 %v1039, %v1263
      %v1265 = vpop.f32.mrb[0].mxu0
      %1266 = vmatprep.mubr.bf16.mxu0 0
      %1267 = vmatmul.mubr.bf16.gmra.mrb[0].mxu0 %v618
      %v1268 = vpop.f32.mrb[0].mxu0
      %v1269 = vadd.f32 %v1044, %v1268
      %v1270 = vpop.f32.mrb[0].mxu0
      %v1271 = vpop.f32.mrb[0].mxu0
      %v1272 = vadd.f32 %v1047, %v1271
      %v1273 = vpop.f32.mrb[0].mxu0
      %1274 = vmatprep.mubr.bf16.mxu0 0
      %1275 = vmatmul.mubr.bf16.gmra.mrb[0].mxu0 %v621
      %v1276 = vpop.f32.mrb[0].mxu0
      %v1277 = vadd.f32 %v1052, %v1276
      %v1278 = vpop.f32.mrb[0].mxu0
      %v1279 = vpop.f32.mrb[0].mxu0
      %v1280 = vadd.f32 %v1055, %v1279
      %v1281 = vpop.f32.mrb[0].mxu0
      %1282 = vmatprep.mubr.bf16.mxu0 0
      %1283 = vmatmul.mubr.bf16.gmra.mrb[0].mxu0 %v624
      %v1284 = vpop.f32.mrb[0].mxu0
      %v1285 = vadd.f32 %v1060, %v1284
      %v1286 = vpop.f32.mrb[0].mxu0
      %v1287 = vpop.f32.mrb[0].mxu0
      %v1288 = vadd.f32 %v1063, %v1287
      %v1289 = vpop.f32.mrb[0].mxu0
      %1290 = vdwg.mxu0
      %v1291 = vadd.f32 %v169, %v1101
      %v1292 = vadd.f32 %v170, %v1104
      %v1293 = vadd.f32 %v171, %v1109
      %v1294 = vadd.f32 %v172, %v1112
      %v1295 = vadd.f32 %v173, %v1117
      %v1296 = vadd.f32 %v174, %v1120
      %v1297 = vadd.f32 %v175, %v1125
      %v1298 = vadd.f32 %v176, %v1128
      %v1299 = vadd.f32 %v177, %v1133
      %v1300 = vadd.f32 %v178, %v1136
      %v1301 = vadd.f32 %v179, %v1141
      %v1302 = vadd.f32 %v180, %v1144
      %v1303 = vadd.f32 %v181, %v1149
      %v1304 = vadd.f32 %v182, %v1152
      %v1305 = vadd.f32 %v183, %v1157
      %v1306 = vadd.f32 %v184, %v1160
      %v1307 = vadd.f32 %v185, %v1165
      %v1308 = vadd.f32 %v186, %v1168
      %v1309 = vadd.f32 %v187, %v1173
      %v1310 = vadd.f32 %v188, %v1176
      %v1311 = vadd.f32 %v189, %v1181
      %v1312 = vadd.f32 %v190, %v1184
      %v1313 = vadd.f32 %v191, %v1189
      %v1314 = vadd.f32 %v192, %v1192
      %v1315 = vadd.f32 %v193, %v1197
      %v1316 = vadd.f32 %v194, %v1200
      %v1317 = vadd.f32 %v195, %v1205
      %v1318 = vadd.f32 %v196, %v1208
      %v1319 = vadd.f32 %v197, %v1213
      %v1320 = vadd.f32 %v198, %v1216
      %v1321 = vadd.f32 %v199, %v1221
      %v1322 = vadd.f32 %v200, %v1224
      %v1323 = vadd.f32 %v201, %v1229
      %v1324 = vadd.f32 %v202, %v1232
      %v1325 = vadd.f32 %v203, %v1237
      %v1326 = vadd.f32 %v204, %v1240
      %v1327 = vadd.f32 %v205, %v1245
      %v1328 = vadd.f32 %v206, %v1248
      %v1329 = vadd.f32 %v207, %v1253
      %v1330 = vadd.f32 %v208, %v1256
      %v1331 = vadd.f32 %v209, %v1261
      %v1332 = vadd.f32 %v210, %v1264
      %v1333 = vadd.f32 %v211, %v1269
      %v1334 = vadd.f32 %v212, %v1272
      %v1335 = vadd.f32 %v213, %v1277
      %v1336 = vadd.f32 %v214, %v1280
      %v1337 = vadd.f32 %v215, %v1285
      %v1338 = vadd.f32 %v216, %v1288
      %1339 = vst [vmem:[#allocation10] sm:$0xff] %v1291
      %1340 = vst [vmem:[#allocation10 + $0x8] sm:$0xff] %v1292
      %1341 = vst [vmem:[#allocation10 + $0x10] sm:$0xff] %v1293
      %1342 = vst [vmem:[#allocation10 + $0x18] sm:$0xff] %v1294
      %1343 = vst [vmem:[#allocation10 + $0x20] sm:$0xff] %v1295
      %1344 = vst [vmem:[#allocation10 + $0x28] sm:$0xff] %v1296
      %1345 = vst [vmem:[#allocation10 + $0x30] sm:$0xff] %v1297
      %1346 = vst [vmem:[#allocation10 + $0x38] sm:$0xff] %v1298
      %1347 = vst [vmem:[#allocation10 + $0x40] sm:$0xff] %v1299
      %1348 = vst [vmem:[#allocation10 + $0x48] sm:$0xff] %v1300
      %1349 = vst [vmem:[#allocation10 + $0x50] sm:$0xff] %v1301
      %1350 = vst [vmem:[#allocation10 + $0x58] sm:$0xff] %v1302
      %1351 = vst [vmem:[#allocation10 + $0x60] sm:$0xff] %v1303
      %1352 = vst [vmem:[#allocation10 + $0x68] sm:$0xff] %v1304
      %1353 = vst [vmem:[#allocation10 + $0x70] sm:$0xff] %v1305
      %1354 = vst [vmem:[#allocation10 + $0x78] sm:$0xff] %v1306
      %1355 = vst [vmem:[#allocation10 + $0x80] sm:$0xff] %v1307
      %1356 = vst [vmem:[#allocation10 + $0x88] sm:$0xff] %v1308
      %1357 = vst [vmem:[#allocation10 + $0x90] sm:$0xff] %v1309
      %1358 = vst [vmem:[#allocation10 + $0x98] sm:$0xff] %v1310
      %1359 = vst [vmem:[#allocation10 + $0xa0] sm:$0xff] %v1311
      %1360 = vst [vmem:[#allocation10 + $0xa8] sm:$0xff] %v1312
      %1361 = vst [vmem:[#allocation10 + $0xb0] sm:$0xff] %v1313
      %1362 = vst [vmem:[#allocation10 + $0xb8] sm:$0xff] %v1314
      %1363 = vst [vmem:[#allocation10 + $0xc0] sm:$0xff] %v1315
      %1364 = vst [vmem:[#allocation10 + $0xc8] sm:$0xff] %v1316
      %1365 = vst [vmem:[#allocation10 + $0xd0] sm:$0xff] %v1317
      %1366 = vst [vmem:[#allocation10 + $0xd8] sm:$0xff] %v1318
      %1367 = vst [vmem:[#allocation10 + $0xe0] sm:$0xff] %v1319
      %1368 = vst [vmem:[#allocation10 + $0xe8] sm:$0xff] %v1320
      %1369 = vst [vmem:[#allocation10 + $0xf0] sm:$0xff] %v1321
      %1370 = vst [vmem:[#allocation10 + $0xf8] sm:$0xff] %v1322
      %1371 = vst [vmem:[#allocation10 + $0x100] sm:$0xff] %v1323
      %1372 = vst [vmem:[#allocation10 + $0x108] sm:$0xff] %v1324
      %1373 = vst [vmem:[#allocation10 + $0x110] sm:$0xff] %v1325
      %1374 = vst [vmem:[#allocation10 + $0x118] sm:$0xff] %v1326
      %1375 = vst [vmem:[#allocation10 + $0x120] sm:$0xff] %v1327
      %1376 = vst [vmem:[#allocation10 + $0x128] sm:$0xff] %v1328
      %1377 = vst [vmem:[#allocation10 + $0x130] sm:$0xff] %v1329
      %1378 = vst [vmem:[#allocation10 + $0x138] sm:$0xff] %v1330
      %1379 = vst [vmem:[#allocation10 + $0x140] sm:$0xff] %v1331
      %1380 = vst [vmem:[#allocation10 + $0x148] sm:$0xff] %v1332
      %1381 = vst [vmem:[#allocation10 + $0x150] sm:$0xff] %v1333
      %1382 = vst [vmem:[#allocation10 + $0x158] sm:$0xff] %v1334
      %1383 = vst [vmem:[#allocation10 + $0x160] sm:$0xff] %v1335
      %1384 = vst [vmem:[#allocation10 + $0x168] sm:$0xff] %v1336
      %1385 = vst [vmem:[#allocation10 + $0x170] sm:$0xff] %v1337
      %1386 = vst [vmem:[#allocation10 + $0x178] sm:$0xff] %v1338
    $region25: #{tpu_custom_call.1} parent=1 // pred_fallthru
      _
    // Predicated region
    $region26: #{tpu_custom_call.1} parent=1 // pred_check
      _
    $region27: #{tpu_custom_call.1} parent=1 // pred_check_branch
      %1388 = sbr.rel (0) target = $region29
    $region28: #{tpu_custom_call.1} parent=1 // pred_region
      %s1390 = ssub.s32 6144, 6144
      %1391 = vsyncadd [#allocation7], %s1390
      %s1392 = sshll.u32 [#allocation10], 4
      %s1393 = int_to_ptr.vmem [resolvable:$true] %s1392
      %1398 = dma.vmem_to_hbm [thread:$0]  %s1393, 6144, %s4, [#allocation7], 128, 128, 8
    $region29: #{tpu_custom_call.1} parent=1 // pred_fallthru
      _
    // Predicated region
    $region30: #{tpu_custom_call.1} parent=1 // pred_check
      _
    $region31: #{tpu_custom_call.1} parent=1 // pred_check_branch
      %1400 = sbr.rel (0) target = $region33
    $region32: #{tpu_custom_call.1} parent=1 // pred_region
      %1401 = dma.done [#allocation7], 6144
    $region33: #{tpu_custom_call.1} parent=1 // pred_fallthru
      _
    %1402 = vsyncpa [#allocation6], 1
    %1403 = vsyncpa [#allocation9], 1
    %1404 = vsyncpa [#allocation7], 1

</llo_original>
